<compile_context>
chip_gen: v6e
topology: v6e:2x2x1
jax: 0.10.0
libtpu: 0.0.40
codegen_flags: <defaults>
</compile_context>

<pallas_src>
import functools

import jax
import jax.numpy as jnp
from jax.experimental import pallas as pl
from jax.experimental.pallas import tpu as pltpu


def _round_up(x, m):
    return (x + m - 1) // m * m


def _pick_tile(length, granule, max_tile):
    """Tile size: multiple of `granule`, <= max_tile, minimizing padding waste.

    Ties broken toward the largest tile (fewer grid steps / less per-step
    overhead).  Padding is real EUP work here, so waste matters more than
    tile count.
    """
    max_tile = max(granule, min(max_tile, _round_up(length, granule)))
    best, best_waste = granule, None
    t = granule
    while t <= max_tile:
        waste = _round_up(length, t) - length
        if best_waste is None or waste < best_waste or (
                waste == best_waste and t > best):
            best, best_waste = t, waste
        t += granule
    return best


def _pick_sub(tile, granule, max_sub):
    """Largest multiple of `granule` dividing `tile` and <= max_sub."""
    best = granule
    s = granule
    while s <= min(tile, max_sub):
        if tile % s == 0:
            best = s
        s += granule
    return best


def addcompat_kernel(q_ref, kt_ref, v_ref, o_ref, *, sub_tq, sub_tk, use_bf16):
    # q_ref : (1, tq, D)   Q tile   (Lq on sublanes, D on lanes)
    # kt_ref: (1, D, tk)   K^T tile (D on sublanes, Lk on lanes -> lane-dense)
    # v_ref : (D,)         in SMEM (scalar reads)
    # o_ref : (1, tq, tk)  lane-dense output tile
    tq = q_ref.shape[1]
    D = q_ref.shape[2]
    tk = kt_ref.shape[2]

    compute_dtype = jnp.bfloat16 if use_bf16 else jnp.float32

    # Sub-block the output so the accumulator (and tanh slab) stay in vregs
    # for the whole D loop.  All slice bounds are trace-time constants, so
    # this is a clean static unroll for Mosaic (no dynamic slicing, no
    # cross-lane XLU reduction, no (tq, tk, D) tensor).
    for qi in range(0, tq, sub_tq):
        # (sub_tq, D) Q chunk, loaded once and reused across the tk sweep.
        q_chunk = q_ref[0, qi:qi + sub_tq, :].astype(compute_dtype)
        for ki in range(0, tk, sub_tk):
            # (D, sub_tk) K^T chunk, reused across the D loop.
            k_chunk = kt_ref[0, :, ki:ki + sub_tk].astype(compute_dtype)

            acc = jnp.zeros((sub_tq, sub_tk), dtype=jnp.float32)
            for d in range(D):
                # (sub_tq, sub_tk) tanh slab on EUP; scalar FMA on VPU.
                t = jnp.tanh(q_chunk[:, d:d + 1] + k_chunk[d:d + 1, :])
                acc = acc + v_ref[d] * t.astype(jnp.float32)

            o_ref[0, qi:qi + sub_tq, ki:ki + sub_tk] = acc.astype(o_ref.dtype)


def add_compat(Q, K, v, *, tq_max=256, tk_max=512, use_bf16=False):
    """Q: (B, Lq, D), K: (B, Lk, D), v: (D,) -> (B, Lq, Lk)."""
    B, Lq, D = Q.shape
    _, Lk, _ = K.shape

    # Transpose K so Lk ends up on the lane axis inside the kernel.
    Kt = jnp.swapaxes(K, 1, 2)                      # (B, D, Lk)

    # Tile sizes: tq sublane-aligned (mult of 8), tk lane-dense (mult of 128),
    # both chosen to minimize padding waste (padding = wasted EUP cycles).
    tq = _pick_tile(Lq, 8, tq_max)
    tk = _pick_tile(Lk, 128, tk_max)

    # Register-resident sub-tiles inside the kernel (<= 8 vregs for the acc).
    sub_tq = _pick_sub(tq, 8, 32)
    sub_tk = _pick_sub(tk, 128, 256)

    Lq_p = _round_up(Lq, tq)
    Lk_p = _round_up(Lk, tk)
    if Lq_p != Lq:
        Q = jnp.pad(Q, ((0, 0), (0, Lq_p - Lq), (0, 0)))
    if Lk_p != Lk:
        Kt = jnp.pad(Kt, ((0, 0), (0, 0), (0, Lk_p - Lk)))

    grid = (B, Lq_p // tq, Lk_p // tk)

    kernel = functools.partial(addcompat_kernel, sub_tq=sub_tq,
                               sub_tk=sub_tk, use_bf16=use_bf16)

    out = pl.pallas_call(
        kernel,
        out_shape=jax.ShapeDtypeStruct((B, Lq_p, Lk_p), Q.dtype),
        grid_spec=pltpu.PrefetchScalarGridSpec(
            num_scalar_prefetch=0,
            grid=grid,
            in_specs=[
                # Q tile: index_map independent of j -> resident over Lk sweep.
                pl.BlockSpec((1, tq, D), lambda b, i, j: (b, i, 0)),
                # K^T tile: lane-dense along Lk.
                pl.BlockSpec((1, D, tk), lambda b, i, j: (b, 0, j)),
                # v: whole vector in SMEM, read as scalars inside the D loop.
                pl.BlockSpec(memory_space=pltpu.MemorySpace.SMEM),
            ],
            out_specs=pl.BlockSpec((1, tq, tk), lambda b, i, j: (b, i, j)),
        ),
        compiler_params=pltpu.CompilerParams(
            # No accumulation across any grid axis -> all parallel
            # (lets v7x megacore shard the j/Lk axis too).
            dimension_semantics=("parallel", "parallel", "parallel")),
    )(Q, Kt, v)

    # Drop lane/sublane padding before returning to the caller.
    return out[:, :Lq, :Lk]


if __name__ == "__main__":
    # Small shapes consistent with the module's forward.
    B, Lq, Lk, D = 2, 8, 8, 32

    key = jax.random.PRNGKey(0)
    kq, kk, kv = jax.random.split(key, 3)

    Q = jax.random.normal(kq, (B, Lq, D), dtype=jnp.float32)
    K = jax.random.normal(kk, (B, Lk, D), dtype=jnp.float32)

    # Deterministic parameter init mirroring nn.Parameter(torch.Tensor(size))
    # with uniform_(-1/sqrt(size), 1/sqrt(size)).
    bound = 1.0 / (D ** 0.5)
    v = jax.random.uniform(kv, (D,), minval=-bound, maxval=bound,
                           dtype=jnp.float32)

    out = add_compat(Q, K, v)          # default f32 path (1e-5 accurate)
    out = jax.block_until_ready(out)

    # Pure-JAX reference for sanity.
    ref = jnp.einsum("bqkd,d->bqk",
                     jnp.tanh(Q[:, :, None, :] + K[:, None, :, :]), v)
    assert out.shape == (B, Lq, Lk)
    assert jnp.allclose(out, ref, atol=1e-5, rtol=1e-5)

    print("KERNEL_OK")
</pallas_src>

<mosaic_0001>
module attributes {stable_mosaic.version = 11 : i64} {
  func.func @addcompat_kernel(%arg0: i32, %arg1: i32, %arg2: i32, %arg3: memref<1x8x32xf32, #tpu.memory_space<vmem>>, %arg4: memref<1x32x128xf32, #tpu.memory_space<vmem>>, %arg5: memref<32xf32, #tpu.memory_space<smem>>, %arg6: memref<1x8x128xf32, #tpu.memory_space<vmem>>) attributes {dimension_semantics = [#tpu.dimension_semantics<parallel>, #tpu.dimension_semantics<parallel>, #tpu.dimension_semantics<parallel>], iteration_bounds = array<i64: 2, 1, 1>, scalar_prefetch = 0 : i64, scratch_operands = 0 : i64, tpu.core_type = #tpu.core_type<tc>, window_params = [{transform_indices = @transform_0, window_bounds = array<i64: 1, 8, 32>}, {transform_indices = @transform_1, window_bounds = array<i64: 1, 32, 128>}, {transform_indices = @transform_2, window_bounds = array<i64: 32>}, {transform_indices = @transform_3, window_bounds = array<i64: 1, 8, 128>}]} {
    %c0 = arith.constant 0 : index
    %c0_0 = arith.constant 0 : index
    %c0_1 = arith.constant 0 : index
    %0 = vector.load %arg3[%c0, %c0_0, %c0_1] : memref<1x8x32xf32, #tpu.memory_space<vmem>>, vector<1x8x32xf32>
    %1 = vector.shape_cast %0 : vector<1x8x32xf32> to vector<8x32xf32>
    %c0_2 = arith.constant 0 : index
    %c0_3 = arith.constant 0 : index
    %c0_4 = arith.constant 0 : index
    %2 = vector.load %arg4[%c0_2, %c0_3, %c0_4] : memref<1x32x128xf32, #tpu.memory_space<vmem>>, vector<1x32x128xf32>
    %3 = vector.shape_cast %2 : vector<1x32x128xf32> to vector<32x128xf32>
    %cst = arith.constant 0.000000e+00 : f32
    %4 = vector.broadcast %cst : f32 to vector<8x128xf32>
    %5 = vector.extract_strided_slice %1 {offsets = [0, 0], sizes = [8, 1], strides = [1, 1]} : vector<8x32xf32> to vector<8x1xf32>
    %6 = vector.extract_strided_slice %3 {offsets = [0, 0], sizes = [1, 128], strides = [1, 1]} : vector<32x128xf32> to vector<1x128xf32>
    %7 = vector.broadcast %5 : vector<8x1xf32> to vector<8x128xf32>
    %8 = vector.broadcast %6 : vector<1x128xf32> to vector<8x128xf32>
    %9 = arith.addf %7, %8 : vector<8x128xf32>
    %10 = math.tanh %9 : vector<8x128xf32>
    %c0_5 = arith.constant 0 : index
    %11 = memref.load %arg5[%c0_5] : memref<32xf32, #tpu.memory_space<smem>>
    %12 = vector.broadcast %11 : f32 to vector<8x128xf32>
    %13 = arith.mulf %12, %10 : vector<8x128xf32>
    %14 = arith.addf %4, %13 : vector<8x128xf32>
    %15 = vector.extract_strided_slice %1 {offsets = [0, 1], sizes = [8, 1], strides = [1, 1]} : vector<8x32xf32> to vector<8x1xf32>
    %16 = vector.extract_strided_slice %3 {offsets = [1, 0], sizes = [1, 128], strides = [1, 1]} : vector<32x128xf32> to vector<1x128xf32>
    %17 = vector.broadcast %15 : vector<8x1xf32> to vector<8x128xf32>
    %18 = vector.broadcast %16 : vector<1x128xf32> to vector<8x128xf32>
    %19 = arith.addf %17, %18 : vector<8x128xf32>
    %20 = math.tanh %19 : vector<8x128xf32>
    %c1 = arith.constant 1 : index
    %21 = memref.load %arg5[%c1] : memref<32xf32, #tpu.memory_space<smem>>
    %22 = vector.broadcast %21 : f32 to vector<8x128xf32>
    %23 = arith.mulf %22, %20 : vector<8x128xf32>
    %24 = arith.addf %14, %23 : vector<8x128xf32>
    %25 = vector.extract_strided_slice %1 {offsets = [0, 2], sizes = [8, 1], strides = [1, 1]} : vector<8x32xf32> to vector<8x1xf32>
    %26 = vector.extract_strided_slice %3 {offsets = [2, 0], sizes = [1, 128], strides = [1, 1]} : vector<32x128xf32> to vector<1x128xf32>
    %27 = vector.broadcast %25 : vector<8x1xf32> to vector<8x128xf32>
    %28 = vector.broadcast %26 : vector<1x128xf32> to vector<8x128xf32>
    %29 = arith.addf %27, %28 : vector<8x128xf32>
    %30 = math.tanh %29 : vector<8x128xf32>
    %c2 = arith.constant 2 : index
    %31 = memref.load %arg5[%c2] : memref<32xf32, #tpu.memory_space<smem>>
    %32 = vector.broadcast %31 : f32 to vector<8x128xf32>
    %33 = arith.mulf %32, %30 : vector<8x128xf32>
    %34 = arith.addf %24, %33 : vector<8x128xf32>
    %35 = vector.extract_strided_slice %1 {offsets = [0, 3], sizes = [8, 1], strides = [1, 1]} : vector<8x32xf32> to vector<8x1xf32>
    %36 = vector.extract_strided_slice %3 {offsets = [3, 0], sizes = [1, 128], strides = [1, 1]} : vector<32x128xf32> to vector<1x128xf32>
    %37 = vector.broadcast %35 : vector<8x1xf32> to vector<8x128xf32>
    %38 = vector.broadcast %36 : vector<1x128xf32> to vector<8x128xf32>
    %39 = arith.addf %37, %38 : vector<8x128xf32>
    %40 = math.tanh %39 : vector<8x128xf32>
    %c3 = arith.constant 3 : index
    %41 = memref.load %arg5[%c3] : memref<32xf32, #tpu.memory_space<smem>>
    %42 = vector.broadcast %41 : f32 to vector<8x128xf32>
    %43 = arith.mulf %42, %40 : vector<8x128xf32>
    %44 = arith.addf %34, %43 : vector<8x128xf32>
    %45 = vector.extract_strided_slice %1 {offsets = [0, 4], sizes = [8, 1], strides = [1, 1]} : vector<8x32xf32> to vector<8x1xf32>
    %46 = vector.extract_strided_slice %3 {offsets = [4, 0], sizes = [1, 128], strides = [1, 1]} : vector<32x128xf32> to vector<1x128xf32>
    %47 = vector.broadcast %45 : vector<8x1xf32> to vector<8x128xf32>
    %48 = vector.broadcast %46 : vector<1x128xf32> to vector<8x128xf32>
    %49 = arith.addf %47, %48 : vector<8x128xf32>
    %50 = math.tanh %49 : vector<8x128xf32>
    %c4 = arith.constant 4 : index
    %51 = memref.load %arg5[%c4] : memref<32xf32, #tpu.memory_space<smem>>
    %52 = vector.broadcast %51 : f32 to vector<8x128xf32>
    %53 = arith.mulf %52, %50 : vector<8x128xf32>
    %54 = arith.addf %44, %53 : vector<8x128xf32>
    %55 = vector.extract_strided_slice %1 {offsets = [0, 5], sizes = [8, 1], strides = [1, 1]} : vector<8x32xf32> to vector<8x1xf32>
    %56 = vector.extract_strided_slice %3 {offsets = [5, 0], sizes = [1, 128], strides = [1, 1]} : vector<32x128xf32> to vector<1x128xf32>
    %57 = vector.broadcast %55 : vector<8x1xf32> to vector<8x128xf32>
    %58 = vector.broadcast %56 : vector<1x128xf32> to vector<8x128xf32>
    %59 = arith.addf %57, %58 : vector<8x128xf32>
    %60 = math.tanh %59 : vector<8x128xf32>
    %c5 = arith.constant 5 : index
    %61 = memref.load %arg5[%c5] : memref<32xf32, #tpu.memory_space<smem>>
    %62 = vector.broadcast %61 : f32 to vector<8x128xf32>
    %63 = arith.mulf %62, %60 : vector<8x128xf32>
    %64 = arith.addf %54, %63 : vector<8x128xf32>
    %65 = vector.extract_strided_slice %1 {offsets = [0, 6], sizes = [8, 1], strides = [1, 1]} : vector<8x32xf32> to vector<8x1xf32>
    %66 = vector.extract_strided_slice %3 {offsets = [6, 0], sizes = [1, 128], strides = [1, 1]} : vector<32x128xf32> to vector<1x128xf32>
    %67 = vector.broadcast %65 : vector<8x1xf32> to vector<8x128xf32>
    %68 = vector.broadcast %66 : vector<1x128xf32> to vector<8x128xf32>
    %69 = arith.addf %67, %68 : vector<8x128xf32>
    %70 = math.tanh %69 : vector<8x128xf32>
    %c6 = arith.constant 6 : index
    %71 = memref.load %arg5[%c6] : memref<32xf32, #tpu.memory_space<smem>>
    %72 = vector.broadcast %71 : f32 to vector<8x128xf32>
    %73 = arith.mulf %72, %70 : vector<8x128xf32>
    %74 = arith.addf %64, %73 : vector<8x128xf32>
    %75 = vector.extract_strided_slice %1 {offsets = [0, 7], sizes = [8, 1], strides = [1, 1]} : vector<8x32xf32> to vector<8x1xf32>
    %76 = vector.extract_strided_slice %3 {offsets = [7, 0], sizes = [1, 128], strides = [1, 1]} : vector<32x128xf32> to vector<1x128xf32>
    %77 = vector.broadcast %75 : vector<8x1xf32> to vector<8x128xf32>
    %78 = vector.broadcast %76 : vector<1x128xf32> to vector<8x128xf32>
    %79 = arith.addf %77, %78 : vector<8x128xf32>
    %80 = math.tanh %79 : vector<8x128xf32>
    %c7 = arith.constant 7 : index
    %81 = memref.load %arg5[%c7] : memref<32xf32, #tpu.memory_space<smem>>
    %82 = vector.broadcast %81 : f32 to vector<8x128xf32>
    %83 = arith.mulf %82, %80 : vector<8x128xf32>
    %84 = arith.addf %74, %83 : vector<8x128xf32>
    %85 = vector.extract_strided_slice %1 {offsets = [0, 8], sizes = [8, 1], strides = [1, 1]} : vector<8x32xf32> to vector<8x1xf32>
    %86 = vector.extract_strided_slice %3 {offsets = [8, 0], sizes = [1, 128], strides = [1, 1]} : vector<32x128xf32> to vector<1x128xf32>
    %87 = vector.broadcast %85 : vector<8x1xf32> to vector<8x128xf32>
    %88 = vector.broadcast %86 : vector<1x128xf32> to vector<8x128xf32>
    %89 = arith.addf %87, %88 : vector<8x128xf32>
    %90 = math.tanh %89 : vector<8x128xf32>
    %c8 = arith.constant 8 : index
    %91 = memref.load %arg5[%c8] : memref<32xf32, #tpu.memory_space<smem>>
    %92 = vector.broadcast %91 : f32 to vector<8x128xf32>
    %93 = arith.mulf %92, %90 : vector<8x128xf32>
    %94 = arith.addf %84, %93 : vector<8x128xf32>
    %95 = vector.extract_strided_slice %1 {offsets = [0, 9], sizes = [8, 1], strides = [1, 1]} : vector<8x32xf32> to vector<8x1xf32>
    %96 = vector.extract_strided_slice %3 {offsets = [9, 0], sizes = [1, 128], strides = [1, 1]} : vector<32x128xf32> to vector<1x128xf32>
    %97 = vector.broadcast %95 : vector<8x1xf32> to vector<8x128xf32>
    %98 = vector.broadcast %96 : vector<1x128xf32> to vector<8x128xf32>
    %99 = arith.addf %97, %98 : vector<8x128xf32>
    %100 = math.tanh %99 : vector<8x128xf32>
    %c9 = arith.constant 9 : index
    %101 = memref.load %arg5[%c9] : memref<32xf32, #tpu.memory_space<smem>>
    %102 = vector.broadcast %101 : f32 to vector<8x128xf32>
    %103 = arith.mulf %102, %100 : vector<8x128xf32>
    %104 = arith.addf %94, %103 : vector<8x128xf32>
    %105 = vector.extract_strided_slice %1 {offsets = [0, 10], sizes = [8, 1], strides = [1, 1]} : vector<8x32xf32> to vector<8x1xf32>
    %106 = vector.extract_strided_slice %3 {offsets = [10, 0], sizes = [1, 128], strides = [1, 1]} : vector<32x128xf32> to vector<1x128xf32>
    %107 = vector.broadcast %105 : vector<8x1xf32> to vector<8x128xf32>
    %108 = vector.broadcast %106 : vector<1x128xf32> to vector<8x128xf32>
    %109 = arith.addf %107, %108 : vector<8x128xf32>
    %110 = math.tanh %109 : vector<8x128xf32>
    %c10 = arith.constant 10 : index
    %111 = memref.load %arg5[%c10] : memref<32xf32, #tpu.memory_space<smem>>
    %112 = vector.broadcast %111 : f32 to vector<8x128xf32>
    %113 = arith.mulf %112, %110 : vector<8x128xf32>
    %114 = arith.addf %104, %113 : vector<8x128xf32>
    %115 = vector.extract_strided_slice %1 {offsets = [0, 11], sizes = [8, 1], strides = [1, 1]} : vector<8x32xf32> to vector<8x1xf32>
    %116 = vector.extract_strided_slice %3 {offsets = [11, 0], sizes = [1, 128], strides = [1, 1]} : vector<32x128xf32> to vector<1x128xf32>
    %117 = vector.broadcast %115 : vector<8x1xf32> to vector<8x128xf32>
    %118 = vector.broadcast %116 : vector<1x128xf32> to vector<8x128xf32>
    %119 = arith.addf %117, %118 : vector<8x128xf32>
    %120 = math.tanh %119 : vector<8x128xf32>
    %c11 = arith.constant 11 : index
    %121 = memref.load %arg5[%c11] : memref<32xf32, #tpu.memory_space<smem>>
    %122 = vector.broadcast %121 : f32 to vector<8x128xf32>
    %123 = arith.mulf %122, %120 : vector<8x128xf32>
    %124 = arith.addf %114, %123 : vector<8x128xf32>
    %125 = vector.extract_strided_slice %1 {offsets = [0, 12], sizes = [8, 1], strides = [1, 1]} : vector<8x32xf32> to vector<8x1xf32>
    %126 = vector.extract_strided_slice %3 {offsets = [12, 0], sizes = [1, 128], strides = [1, 1]} : vector<32x128xf32> to vector<1x128xf32>
    %127 = vector.broadcast %125 : vector<8x1xf32> to vector<8x128xf32>
    %128 = vector.broadcast %126 : vector<1x128xf32> to vector<8x128xf32>
    %129 = arith.addf %127, %128 : vector<8x128xf32>
    %130 = math.tanh %129 : vector<8x128xf32>
    %c12 = arith.constant 12 : index
    %131 = memref.load %arg5[%c12] : memref<32xf32, #tpu.memory_space<smem>>
    %132 = vector.broadcast %131 : f32 to vector<8x128xf32>
    %133 = arith.mulf %132, %130 : vector<8x128xf32>
    %134 = arith.addf %124, %133 : vector<8x128xf32>
    %135 = vector.extract_strided_slice %1 {offsets = [0, 13], sizes = [8, 1], strides = [1, 1]} : vector<8x32xf32> to vector<8x1xf32>
    %136 = vector.extract_strided_slice %3 {offsets = [13, 0], sizes = [1, 128], strides = [1, 1]} : vector<32x128xf32> to vector<1x128xf32>
    %137 = vector.broadcast %135 : vector<8x1xf32> to vector<8x128xf32>
    %138 = vector.broadcast %136 : vector<1x128xf32> to vector<8x128xf32>
    %139 = arith.addf %137, %138 : vector<8x128xf32>
    %140 = math.tanh %139 : vector<8x128xf32>
    %c13 = arith.constant 13 : index
    %141 = memref.load %arg5[%c13] : memref<32xf32, #tpu.memory_space<smem>>
    %142 = vector.broadcast %141 : f32 to vector<8x128xf32>
    %143 = arith.mulf %142, %140 : vector<8x128xf32>
    %144 = arith.addf %134, %143 : vector<8x128xf32>
    %145 = vector.extract_strided_slice %1 {offsets = [0, 14], sizes = [8, 1], strides = [1, 1]} : vector<8x32xf32> to vector<8x1xf32>
    %146 = vector.extract_strided_slice %3 {offsets = [14, 0], sizes = [1, 128], strides = [1, 1]} : vector<32x128xf32> to vector<1x128xf32>
    %147 = vector.broadcast %145 : vector<8x1xf32> to vector<8x128xf32>
    %148 = vector.broadcast %146 : vector<1x128xf32> to vector<8x128xf32>
    %149 = arith.addf %147, %148 : vector<8x128xf32>
    %150 = math.tanh %149 : vector<8x128xf32>
    %c14 = arith.constant 14 : index
    %151 = memref.load %arg5[%c14] : memref<32xf32, #tpu.memory_space<smem>>
    %152 = vector.broadcast %151 : f32 to vector<8x128xf32>
    %153 = arith.mulf %152, %150 : vector<8x128xf32>
    %154 = arith.addf %144, %153 : vector<8x128xf32>
    %155 = vector.extract_strided_slice %1 {offsets = [0, 15], sizes = [8, 1], strides = [1, 1]} : vector<8x32xf32> to vector<8x1xf32>
    %156 = vector.extract_strided_slice %3 {offsets = [15, 0], sizes = [1, 128], strides = [1, 1]} : vector<32x128xf32> to vector<1x128xf32>
    %157 = vector.broadcast %155 : vector<8x1xf32> to vector<8x128xf32>
    %158 = vector.broadcast %156 : vector<1x128xf32> to vector<8x128xf32>
    %159 = arith.addf %157, %158 : vector<8x128xf32>
    %160 = math.tanh %159 : vector<8x128xf32>
    %c15 = arith.constant 15 : index
    %161 = memref.load %arg5[%c15] : memref<32xf32, #tpu.memory_space<smem>>
    %162 = vector.broadcast %161 : f32 to vector<8x128xf32>
    %163 = arith.mulf %162, %160 : vector<8x128xf32>
    %164 = arith.addf %154, %163 : vector<8x128xf32>
    %165 = vector.extract_strided_slice %1 {offsets = [0, 16], sizes = [8, 1], strides = [1, 1]} : vector<8x32xf32> to vector<8x1xf32>
    %166 = vector.extract_strided_slice %3 {offsets = [16, 0], sizes = [1, 128], strides = [1, 1]} : vector<32x128xf32> to vector<1x128xf32>
    %167 = vector.broadcast %165 : vector<8x1xf32> to vector<8x128xf32>
    %168 = vector.broadcast %166 : vector<1x128xf32> to vector<8x128xf32>
    %169 = arith.addf %167, %168 : vector<8x128xf32>
    %170 = math.tanh %169 : vector<8x128xf32>
    %c16 = arith.constant 16 : index
    %171 = memref.load %arg5[%c16] : memref<32xf32, #tpu.memory_space<smem>>
    %172 = vector.broadcast %171 : f32 to vector<8x128xf32>
    %173 = arith.mulf %172, %170 : vector<8x128xf32>
    %174 = arith.addf %164, %173 : vector<8x128xf32>
    %175 = vector.extract_strided_slice %1 {offsets = [0, 17], sizes = [8, 1], strides = [1, 1]} : vector<8x32xf32> to vector<8x1xf32>
    %176 = vector.extract_strided_slice %3 {offsets = [17, 0], sizes = [1, 128], strides = [1, 1]} : vector<32x128xf32> to vector<1x128xf32>
    %177 = vector.broadcast %175 : vector<8x1xf32> to vector<8x128xf32>
    %178 = vector.broadcast %176 : vector<1x128xf32> to vector<8x128xf32>
    %179 = arith.addf %177, %178 : vector<8x128xf32>
    %180 = math.tanh %179 : vector<8x128xf32>
    %c17 = arith.constant 17 : index
    %181 = memref.load %arg5[%c17] : memref<32xf32, #tpu.memory_space<smem>>
    %182 = vector.broadcast %181 : f32 to vector<8x128xf32>
    %183 = arith.mulf %182, %180 : vector<8x128xf32>
    %184 = arith.addf %174, %183 : vector<8x128xf32>
    %185 = vector.extract_strided_slice %1 {offsets = [0, 18], sizes = [8, 1], strides = [1, 1]} : vector<8x32xf32> to vector<8x1xf32>
    %186 = vector.extract_strided_slice %3 {offsets = [18, 0], sizes = [1, 128], strides = [1, 1]} : vector<32x128xf32> to vector<1x128xf32>
    %187 = vector.broadcast %185 : vector<8x1xf32> to vector<8x128xf32>
    %188 = vector.broadcast %186 : vector<1x128xf32> to vector<8x128xf32>
    %189 = arith.addf %187, %188 : vector<8x128xf32>
    %190 = math.tanh %189 : vector<8x128xf32>
    %c18 = arith.constant 18 : index
    %191 = memref.load %arg5[%c18] : memref<32xf32, #tpu.memory_space<smem>>
    %192 = vector.broadcast %191 : f32 to vector<8x128xf32>
    %193 = arith.mulf %192, %190 : vector<8x128xf32>
    %194 = arith.addf %184, %193 : vector<8x128xf32>
    %195 = vector.extract_strided_slice %1 {offsets = [0, 19], sizes = [8, 1], strides = [1, 1]} : vector<8x32xf32> to vector<8x1xf32>
    %196 = vector.extract_strided_slice %3 {offsets = [19, 0], sizes = [1, 128], strides = [1, 1]} : vector<32x128xf32> to vector<1x128xf32>
    %197 = vector.broadcast %195 : vector<8x1xf32> to vector<8x128xf32>
    %198 = vector.broadcast %196 : vector<1x128xf32> to vector<8x128xf32>
    %199 = arith.addf %197, %198 : vector<8x128xf32>
    %200 = math.tanh %199 : vector<8x128xf32>
    %c19 = arith.constant 19 : index
    %201 = memref.load %arg5[%c19] : memref<32xf32, #tpu.memory_space<smem>>
    %202 = vector.broadcast %201 : f32 to vector<8x128xf32>
    %203 = arith.mulf %202, %200 : vector<8x128xf32>
    %204 = arith.addf %194, %203 : vector<8x128xf32>
    %205 = vector.extract_strided_slice %1 {offsets = [0, 20], sizes = [8, 1], strides = [1, 1]} : vector<8x32xf32> to vector<8x1xf32>
    %206 = vector.extract_strided_slice %3 {offsets = [20, 0], sizes = [1, 128], strides = [1, 1]} : vector<32x128xf32> to vector<1x128xf32>
    %207 = vector.broadcast %205 : vector<8x1xf32> to vector<8x128xf32>
    %208 = vector.broadcast %206 : vector<1x128xf32> to vector<8x128xf32>
    %209 = arith.addf %207, %208 : vector<8x128xf32>
    %210 = math.tanh %209 : vector<8x128xf32>
    %c20 = arith.constant 20 : index
    %211 = memref.load %arg5[%c20] : memref<32xf32, #tpu.memory_space<smem>>
    %212 = vector.broadcast %211 : f32 to vector<8x128xf32>
    %213 = arith.mulf %212, %210 : vector<8x128xf32>
    %214 = arith.addf %204, %213 : vector<8x128xf32>
    %215 = vector.extract_strided_slice %1 {offsets = [0, 21], sizes = [8, 1], strides = [1, 1]} : vector<8x32xf32> to vector<8x1xf32>
    %216 = vector.extract_strided_slice %3 {offsets = [21, 0], sizes = [1, 128], strides = [1, 1]} : vector<32x128xf32> to vector<1x128xf32>
    %217 = vector.broadcast %215 : vector<8x1xf32> to vector<8x128xf32>
    %218 = vector.broadcast %216 : vector<1x128xf32> to vector<8x128xf32>
    %219 = arith.addf %217, %218 : vector<8x128xf32>
    %220 = math.tanh %219 : vector<8x128xf32>
    %c21 = arith.constant 21 : index
    %221 = memref.load %arg5[%c21] : memref<32xf32, #tpu.memory_space<smem>>
    %222 = vector.broadcast %221 : f32 to vector<8x128xf32>
    %223 = arith.mulf %222, %220 : vector<8x128xf32>
    %224 = arith.addf %214, %223 : vector<8x128xf32>
    %225 = vector.extract_strided_slice %1 {offsets = [0, 22], sizes = [8, 1], strides = [1, 1]} : vector<8x32xf32> to vector<8x1xf32>
    %226 = vector.extract_strided_slice %3 {offsets = [22, 0], sizes = [1, 128], strides = [1, 1]} : vector<32x128xf32> to vector<1x128xf32>
    %227 = vector.broadcast %225 : vector<8x1xf32> to vector<8x128xf32>
    %228 = vector.broadcast %226 : vector<1x128xf32> to vector<8x128xf32>
    %229 = arith.addf %227, %228 : vector<8x128xf32>
    %230 = math.tanh %229 : vector<8x128xf32>
    %c22 = arith.constant 22 : index
    %231 = memref.load %arg5[%c22] : memref<32xf32, #tpu.memory_space<smem>>
    %232 = vector.broadcast %231 : f32 to vector<8x128xf32>
    %233 = arith.mulf %232, %230 : vector<8x128xf32>
    %234 = arith.addf %224, %233 : vector<8x128xf32>
    %235 = vector.extract_strided_slice %1 {offsets = [0, 23], sizes = [8, 1], strides = [1, 1]} : vector<8x32xf32> to vector<8x1xf32>
    %236 = vector.extract_strided_slice %3 {offsets = [23, 0], sizes = [1, 128], strides = [1, 1]} : vector<32x128xf32> to vector<1x128xf32>
    %237 = vector.broadcast %235 : vector<8x1xf32> to vector<8x128xf32>
    %238 = vector.broadcast %236 : vector<1x128xf32> to vector<8x128xf32>
    %239 = arith.addf %237, %238 : vector<8x128xf32>
    %240 = math.tanh %239 : vector<8x128xf32>
    %c23 = arith.constant 23 : index
    %241 = memref.load %arg5[%c23] : memref<32xf32, #tpu.memory_space<smem>>
    %242 = vector.broadcast %241 : f32 to vector<8x128xf32>
    %243 = arith.mulf %242, %240 : vector<8x128xf32>
    %244 = arith.addf %234, %243 : vector<8x128xf32>
    %245 = vector.extract_strided_slice %1 {offsets = [0, 24], sizes = [8, 1], strides = [1, 1]} : vector<8x32xf32> to vector<8x1xf32>
    %246 = vector.extract_strided_slice %3 {offsets = [24, 0], sizes = [1, 128], strides = [1, 1]} : vector<32x128xf32> to vector<1x128xf32>
    %247 = vector.broadcast %245 : vector<8x1xf32> to vector<8x128xf32>
    %248 = vector.broadcast %246 : vector<1x128xf32> to vector<8x128xf32>
    %249 = arith.addf %247, %248 : vector<8x128xf32>
    %250 = math.tanh %249 : vector<8x128xf32>
    %c24 = arith.constant 24 : index
    %251 = memref.load %arg5[%c24] : memref<32xf32, #tpu.memory_space<smem>>
    %252 = vector.broadcast %251 : f32 to vector<8x128xf32>
    %253 = arith.mulf %252, %250 : vector<8x128xf32>
    %254 = arith.addf %244, %253 : vector<8x128xf32>
    %255 = vector.extract_strided_slice %1 {offsets = [0, 25], sizes = [8, 1], strides = [1, 1]} : vector<8x32xf32> to vector<8x1xf32>
    %256 = vector.extract_strided_slice %3 {offsets = [25, 0], sizes = [1, 128], strides = [1, 1]} : vector<32x128xf32> to vector<1x128xf32>
    %257 = vector.broadcast %255 : vector<8x1xf32> to vector<8x128xf32>
    %258 = vector.broadcast %256 : vector<1x128xf32> to vector<8x128xf32>
    %259 = arith.addf %257, %258 : vector<8x128xf32>
    %260 = math.tanh %259 : vector<8x128xf32>
    %c25 = arith.constant 25 : index
    %261 = memref.load %arg5[%c25] : memref<32xf32, #tpu.memory_space<smem>>
    %262 = vector.broadcast %261 : f32 to vector<8x128xf32>
    %263 = arith.mulf %262, %260 : vector<8x128xf32>
    %264 = arith.addf %254, %263 : vector<8x128xf32>
    %265 = vector.extract_strided_slice %1 {offsets = [0, 26], sizes = [8, 1], strides = [1, 1]} : vector<8x32xf32> to vector<8x1xf32>
    %266 = vector.extract_strided_slice %3 {offsets = [26, 0], sizes = [1, 128], strides = [1, 1]} : vector<32x128xf32> to vector<1x128xf32>
    %267 = vector.broadcast %265 : vector<8x1xf32> to vector<8x128xf32>
    %268 = vector.broadcast %266 : vector<1x128xf32> to vector<8x128xf32>
    %269 = arith.addf %267, %268 : vector<8x128xf32>
    %270 = math.tanh %269 : vector<8x128xf32>
    %c26 = arith.constant 26 : index
    %271 = memref.load %arg5[%c26] : memref<32xf32, #tpu.memory_space<smem>>
    %272 = vector.broadcast %271 : f32 to vector<8x128xf32>
    %273 = arith.mulf %272, %270 : vector<8x128xf32>
    %274 = arith.addf %264, %273 : vector<8x128xf32>
    %275 = vector.extract_strided_slice %1 {offsets = [0, 27], sizes = [8, 1], strides = [1, 1]} : vector<8x32xf32> to vector<8x1xf32>
    %276 = vector.extract_strided_slice %3 {offsets = [27, 0], sizes = [1, 128], strides = [1, 1]} : vector<32x128xf32> to vector<1x128xf32>
    %277 = vector.broadcast %275 : vector<8x1xf32> to vector<8x128xf32>
    %278 = vector.broadcast %276 : vector<1x128xf32> to vector<8x128xf32>
    %279 = arith.addf %277, %278 : vector<8x128xf32>
    %280 = math.tanh %279 : vector<8x128xf32>
    %c27 = arith.constant 27 : index
    %281 = memref.load %arg5[%c27] : memref<32xf32, #tpu.memory_space<smem>>
    %282 = vector.broadcast %281 : f32 to vector<8x128xf32>
    %283 = arith.mulf %282, %280 : vector<8x128xf32>
    %284 = arith.addf %274, %283 : vector<8x128xf32>
    %285 = vector.extract_strided_slice %1 {offsets = [0, 28], sizes = [8, 1], strides = [1, 1]} : vector<8x32xf32> to vector<8x1xf32>
    %286 = vector.extract_strided_slice %3 {offsets = [28, 0], sizes = [1, 128], strides = [1, 1]} : vector<32x128xf32> to vector<1x128xf32>
    %287 = vector.broadcast %285 : vector<8x1xf32> to vector<8x128xf32>
    %288 = vector.broadcast %286 : vector<1x128xf32> to vector<8x128xf32>
    %289 = arith.addf %287, %288 : vector<8x128xf32>
    %290 = math.tanh %289 : vector<8x128xf32>
    %c28 = arith.constant 28 : index
    %291 = memref.load %arg5[%c28] : memref<32xf32, #tpu.memory_space<smem>>
    %292 = vector.broadcast %291 : f32 to vector<8x128xf32>
    %293 = arith.mulf %292, %290 : vector<8x128xf32>
    %294 = arith.addf %284, %293 : vector<8x128xf32>
    %295 = vector.extract_strided_slice %1 {offsets = [0, 29], sizes = [8, 1], strides = [1, 1]} : vector<8x32xf32> to vector<8x1xf32>
    %296 = vector.extract_strided_slice %3 {offsets = [29, 0], sizes = [1, 128], strides = [1, 1]} : vector<32x128xf32> to vector<1x128xf32>
    %297 = vector.broadcast %295 : vector<8x1xf32> to vector<8x128xf32>
    %298 = vector.broadcast %296 : vector<1x128xf32> to vector<8x128xf32>
    %299 = arith.addf %297, %298 : vector<8x128xf32>
    %300 = math.tanh %299 : vector<8x128xf32>
    %c29 = arith.constant 29 : index
    %301 = memref.load %arg5[%c29] : memref<32xf32, #tpu.memory_space<smem>>
    %302 = vector.broadcast %301 : f32 to vector<8x128xf32>
    %303 = arith.mulf %302, %300 : vector<8x128xf32>
    %304 = arith.addf %294, %303 : vector<8x128xf32>
    %305 = vector.extract_strided_slice %1 {offsets = [0, 30], sizes = [8, 1], strides = [1, 1]} : vector<8x32xf32> to vector<8x1xf32>
    %306 = vector.extract_strided_slice %3 {offsets = [30, 0], sizes = [1, 128], strides = [1, 1]} : vector<32x128xf32> to vector<1x128xf32>
    %307 = vector.broadcast %305 : vector<8x1xf32> to vector<8x128xf32>
    %308 = vector.broadcast %306 : vector<1x128xf32> to vector<8x128xf32>
    %309 = arith.addf %307, %308 : vector<8x128xf32>
    %310 = math.tanh %309 : vector<8x128xf32>
    %c30 = arith.constant 30 : index
    %311 = memref.load %arg5[%c30] : memref<32xf32, #tpu.memory_space<smem>>
    %312 = vector.broadcast %311 : f32 to vector<8x128xf32>
    %313 = arith.mulf %312, %310 : vector<8x128xf32>
    %314 = arith.addf %304, %313 : vector<8x128xf32>
    %315 = vector.extract_strided_slice %1 {offsets = [0, 31], sizes = [8, 1], strides = [1, 1]} : vector<8x32xf32> to vector<8x1xf32>
    %316 = vector.extract_strided_slice %3 {offsets = [31, 0], sizes = [1, 128], strides = [1, 1]} : vector<32x128xf32> to vector<1x128xf32>
    %317 = vector.broadcast %315 : vector<8x1xf32> to vector<8x128xf32>
    %318 = vector.broadcast %316 : vector<1x128xf32> to vector<8x128xf32>
    %319 = arith.addf %317, %318 : vector<8x128xf32>
    %320 = math.tanh %319 : vector<8x128xf32>
    %c31 = arith.constant 31 : index
    %321 = memref.load %arg5[%c31] : memref<32xf32, #tpu.memory_space<smem>>
    %322 = vector.broadcast %321 : f32 to vector<8x128xf32>
    %323 = arith.mulf %322, %320 : vector<8x128xf32>
    %324 = arith.addf %314, %323 : vector<8x128xf32>
    %c0_6 = arith.constant 0 : index
    %c0_7 = arith.constant 0 : index
    %c0_8 = arith.constant 0 : index
    %325 = vector.load %arg6[%c0_6, %c0_7, %c0_8] : memref<1x8x128xf32, #tpu.memory_space<vmem>>, vector<1x8x128xf32>
    %326 = vector.shape_cast %325 : vector<1x8x128xf32> to vector<8x128xf32>
    %327 = vector.shape_cast %324 : vector<8x128xf32> to vector<1x8x128xf32>
    tpu.vector_store %arg6[%c0_6, %c0_7, %c0_8], %327 {strides = array<i32>} : memref<1x8x128xf32, #tpu.memory_space<vmem>>, vector<1x8x128xf32>,
    return
  }
  func.func @transform_0(%arg0: i32, %arg1: i32, %arg2: i32) -> (i32, i32, i32) {
    %c0_i32 = arith.constant 0 : i32
    %c0_i32_0 = arith.constant 0 : i32
    return %arg0, %arg1, %c0_i32 : i32, i32, i32
  }
  func.func @transform_1(%arg0: i32, %arg1: i32, %arg2: i32) -> (i32, i32, i32) {
    %c0_i32 = arith.constant 0 : i32
    %c0_i32_0 = arith.constant 0 : i32
    return %arg0, %c0_i32, %arg2 : i32, i32, i32
  }
  func.func @transform_2(%arg0: i32, %arg1: i32, %arg2: i32) -> i32 {
    %c0_i32 = arith.constant 0 : i32
    %c0_i32_0 = arith.constant 0 : i32
    return %c0_i32 : i32
  }
  func.func @transform_3(%arg0: i32, %arg1: i32, %arg2: i32) -> (i32, i32, i32) {
    %c0_i32 = arith.constant 0 : i32
    return %arg0, %arg1, %arg2 : i32, i32, i32
  }
}

</mosaic_0001>

<llo_original>
// kernel: tpu_custom_call.1
$region0: #{tpu_custom_call.1}
  #allocation0 [shape = 'u32[]', space=smem, size = 0x4, offset = 0x4, fixed_abs, tag = 'smem constant byte address 0x4 - core index']
  #allocation1 [shape = 'u32[144,128]{1,0:T(1,128)}', space=vmem, size = 0x12000, scoped, tag = 'internal scratch']
  %s0 = inlined_call_operand.hbm [shape: f32[2,8,32], index: 0, kind: input, shape index: {}]
  %s1 = inlined_call_operand.hbm [shape: f32[2,32,128], index: 1, kind: input, shape index: {}]
  %s2 = inlined_call_operand.vmem [shape: f32[32], index: 2, kind: input, shape index: {}]
  %s3 = inlined_call_operand.hbm [shape: f32[2,8,128], index: 3, kind: output, shape index: {}]
  %s4 = sld [smem:[#allocation0]]
  $region57: #{tpu_custom_call.1} parent=0
    _
  %s6 = ssub.s32 1, %s4
  %s7 = scalar_select 0, %s6, %s4
  $region1: #{tpu_custom_call.1} parent=0
    #allocation2 [shape = 'u8[8192]{0}', space=vmem, size = 0x2000, scoped, tag = 'input window, operand 0']
    #allocation3 [shape = 's32[2]{0}', space=sflag, size = 0x8, scoped, tag = 'scoped memory for tpu_custom_call.1']
    #allocation4 [shape = 's32[2]{0}', space=sflag, size = 0x8, scoped, tag = 'scoped memory for tpu_custom_call.1']
    #allocation5 [shape = 's32[2]{0}', space=sflag, size = 0x8, scoped, tag = 'scoped memory for tpu_custom_call.1']
    #allocation6 [shape = 'u8[32768]{0}', space=vmem, size = 0x8000, scoped, tag = 'input window, operand 1']
    #allocation7 [shape = 's32[2]{0}', space=sflag, size = 0x8, scoped, tag = 'scoped memory for tpu_custom_call.1']
    #allocation8 [shape = 'u8[512]{0}', space=smem, size = 0x200, scoped, tag = 'input window, operand 2, single buffered']
    #allocation9 [shape = 'u8[8192]{0}', space=vmem, size = 0x2000, scoped, tag = 'output window, operand 0']
    %8 = vsyncpa [#allocation3], 0
    %s9 = scalar_lea.sflag [#allocation3], 1
    %10 = vsyncpa %s9, 0
    %11 = vsyncpa [#allocation7], 0
    %s12 = scalar_lea.sflag [#allocation7], 1
    %13 = vsyncpa %s12, 0
    %14 = vsyncpa [#allocation5], 0
    %15 = vsyncpa [#allocation4], 0
    %s16 = scalar_lea.sflag [#allocation4], 1
    %17 = vsyncpa %s16, 0
    loop: start=0, step=1, limit=4
    $region2: #{tpu_custom_call.1} parent=1 // loop_pre_header
      _
    $region3: #{tpu_custom_call.1} parent=1 // loop_header
      %s19 = sphi 0, %s23
      %p20 = scmp.ge.s32.totalorder %s19, 4
      %s26 = sphi 0, %s45
      %s27 = sphi 0, %s41
      %s28 = sphi 0, %s37
      %s29 = sphi 0, %s26
      %s30 = sphi 0, %s27
      %s31 = sphi 0, %s28
      %s32 = sphi 0, %s29
      %s33 = sphi 0, %s30
      %s34 = sphi 0, %s31
      %s50 = sphi 0, %s52
      %s53 = sphi 0, %s50
      %s54 = sphi 0, %s53
      %s70 = sphi 0, %s54
      %s78 = sphi 0, %s80
      %s81 = sphi 0, %s78
      %s82 = sphi 0, %s81
      %s98 = sphi 0, %s82
      %s102 = sphi 0, %s102
      %s104 = sphi 0, %s102
      %s105 = sphi 0, %s104
      %s119 = sphi 0, %s105
      %s129 = sphi 0, %s131
      %s132 = sphi 0, %s129
      %s133 = sphi 0, %s132
      %s149 = sphi 0, %s133
    $region4: #{tpu_custom_call.1} parent=1 // loop_header_branch
      %22 = sbr.rel (%p20) target = $region8
    $region5: #{tpu_custom_call.1} parent=1 // loop_body
      %s24 = ssub.s32 %s19, 1
      %s25 = ssub.s32 %s19, 2
      %s35 = sadd.s32 1, %s28
      %p36 = scmp.ge.s32.totalorder %s35, 1
      %s37 = scalar_select %p36, 0, %s35
      %s38 = sadd.s32 1, %s27
      %s39 = scalar_select %p36, %s38, %s27
      %p40 = scmp.ge.s32.totalorder %s39, 1
      %s41 = scalar_select %p40, 0, %s39
      %s42 = sadd.s32 1, %s26
      %s43 = scalar_select %p40, %s42, %s26
      %p44 = scmp.ge.s32.totalorder %s43, 2
      %s45 = scalar_select %p44, 0, %s43
      %s46 = ssub.s32 %s26, %s45
      %s47 = ssub.s32 %s27, %s41
      %s48 = sor.u32 %s46, %s47
      %p49 = scmp.eq.s32.totalorder %s48, 0
      %s51 = sadd.s32 %s50, 1
      %s52 = scalar_select %p49, %s50, %s51
      %p55 = pneg %p49
      %p56 = scmp.eq.s32.totalorder %s19, 1
      %p57 = por %p55, %p56
      %p58 = scmp.ne.s32.totalorder %s50, %s53
      %p59 = scmp.eq.s32.totalorder %s19, 0
      %p60 = por %p58, %p59
      %p61 = scmp.ne.s32.totalorder %s50, %s53
      %p62 = scmp.eq.s32.totalorder %s24, 1
      %p63 = por %p61, %p62
      %p64 = scmp.ne.s32.totalorder %s53, %s54
      %p65 = scmp.eq.s32.totalorder %s24, 0
      %p66 = por %p64, %p65
      %p67 = scmp.ne.s32.totalorder %s53, %s54
      %p68 = scmp.eq.s32.totalorder %s25, 1
      %p69 = por %p67, %p68
      %p71 = scmp.ne.s32.totalorder %s54, %s70
      %p72 = scmp.eq.s32.totalorder %s25, 0
      %p73 = por %p71, %p72
      %s74 = ssub.s32 %s26, %s45
      %s75 = ssub.s32 %s28, %s37
      %s76 = sor.u32 %s74, %s75
      %p77 = scmp.eq.s32.totalorder %s76, 0
      %s79 = sadd.s32 %s78, 1
      %s80 = scalar_select %p77, %s78, %s79
      %p83 = pneg %p77
      %p84 = scmp.eq.s32.totalorder %s19, 1
      %p85 = por %p83, %p84
      %p86 = scmp.ne.s32.totalorder %s78, %s81
      %p87 = scmp.eq.s32.totalorder %s19, 0
      %p88 = por %p86, %p87
      %p89 = scmp.ne.s32.totalorder %s78, %s81
      %p90 = scmp.eq.s32.totalorder %s24, 1
      %p91 = por %p89, %p90
      %p92 = scmp.ne.s32.totalorder %s81, %s82
      %p93 = scmp.eq.s32.totalorder %s24, 0
      %p94 = por %p92, %p93
      %p95 = scmp.ne.s32.totalorder %s81, %s82
      %p96 = scmp.eq.s32.totalorder %s25, 1
      %p97 = por %p95, %p96
      %p99 = scmp.ne.s32.totalorder %s82, %s98
      %p100 = scmp.eq.s32.totalorder %s25, 0
      %p101 = por %p99, %p100
      %s103 = sadd.s32 %s102, 1
      %p106 = scmp.eq.s32.totalorder %s19, 1
      %p107 = scmp.ne.s32.totalorder %s102, %s104
      %p108 = scmp.eq.s32.totalorder %s19, 0
      %p109 = por %p107, %p108
      %p110 = scmp.ne.s32.totalorder %s102, %s104
      %p111 = scmp.eq.s32.totalorder %s24, 1
      %p112 = por %p110, %p111
      %p113 = scmp.ne.s32.totalorder %s104, %s105
      %p114 = scmp.eq.s32.totalorder %s24, 0
      %p115 = por %p113, %p114
      %p116 = scmp.ne.s32.totalorder %s104, %s105
      %p117 = scmp.eq.s32.totalorder %s25, 1
      %p118 = por %p116, %p117
      %p120 = scmp.ne.s32.totalorder %s105, %s119
      %p121 = scmp.eq.s32.totalorder %s25, 0
      %p122 = por %p120, %p121
      %s123 = ssub.s32 %s26, %s45
      %s124 = ssub.s32 %s27, %s41
      %s125 = sor.u32 %s123, %s124
      %s126 = ssub.s32 %s28, %s37
      %s127 = sor.u32 %s125, %s126
      %p128 = scmp.eq.s32.totalorder %s127, 0
      %s130 = sadd.s32 %s129, 1
      %s131 = scalar_select %p128, %s129, %s130
      %p134 = pneg %p128
      %p135 = scmp.eq.s32.totalorder %s19, 1
      %p136 = por %p134, %p135
      %p137 = scmp.ne.s32.totalorder %s129, %s132
      %p138 = scmp.eq.s32.totalorder %s19, 0
      %p139 = por %p137, %p138
      %p140 = scmp.ne.s32.totalorder %s129, %s132
      %p141 = scmp.eq.s32.totalorder %s24, 1
      %p142 = por %p140, %p141
      %p143 = scmp.ne.s32.totalorder %s132, %s133
      %p144 = scmp.eq.s32.totalorder %s24, 0
      %p145 = por %p143, %p144
      %p146 = scmp.ne.s32.totalorder %s132, %s133
      %p147 = scmp.eq.s32.totalorder %s25, 1
      %p148 = por %p146, %p147
      %p150 = scmp.ne.s32.totalorder %s133, %s149
      %p151 = scmp.eq.s32.totalorder %s25, 0
      %p152 = por %p150, %p151
      %p153 = scmp.le.s32.totalorder 1, %s19
      %p154 = scmp.lt.s32.totalorder %s19, 3
      %p155 = pnand %p153, %p154
      %p156 = pneg %p155
      // Predicated region
      $region9: #{tpu_custom_call.1} parent=5 // pred_check
        _
      $region10: #{tpu_custom_call.1} parent=5 // pred_check_branch
        %158 = sbr.rel (%p155) target = $region12
      $region11: #{tpu_custom_call.1} parent=5 // pred_region
        %s159 = ssub.s32 %s19, 1
        // Predicated region
        $region13: #{tpu_custom_call.1} parent=11 // pred_check
          %p160 = pneg %p115
        $region14: #{tpu_custom_call.1} parent=11 // pred_check_branch
          %162 = sbr.rel (%p160) target = $region16
        $region15: #{tpu_custom_call.1} parent=11 // pred_region
          %s164 = ssub.s32 16, 16
          %165 = vsyncadd [#allocation5], %s164
          %s167 = sshll.u32 %s2, 4
          %s168 = int_to_ptr.vmem [resolvable:$true] %s167
          %170 = dma.vmem_to_smem %s168, 16, [#allocation8], [#allocation5]
        $region16: #{tpu_custom_call.1} parent=11 // pred_fallthru
          _
      $region12: #{tpu_custom_call.1} parent=5 // pred_fallthru
        _
      %p171 = scmp.lt.s32.totalorder %s19, 2
      // Predicated region
      $region17: #{tpu_custom_call.1} parent=5 // pred_check
        %p172 = pneg %p171
      $region18: #{tpu_custom_call.1} parent=5 // pred_check_branch
        %174 = sbr.rel (%p172) target = $region20
      $region19: #{tpu_custom_call.1} parent=5 // pred_region
        // Predicated region
        $region21: #{tpu_custom_call.1} parent=19 // pred_check
          %p175 = pneg %p60
        $region22: #{tpu_custom_call.1} parent=19 // pred_check_branch
          %177 = sbr.rel (%p175) target = $region24
        $region23: #{tpu_custom_call.1} parent=19 // pred_region
          %s178 = sand.u32 %s50, 1
          %s179 = scalar_lea.sflag [#allocation3], %s178
          %s180 = sand.u32 %s50, 1
          %s181 = smul.addr %s180, 8
          %s182 = scalar_lea.vmem [#allocation2], %s181
          %s184 = ssub.s32 128, 128
          %185 = vsyncadd %s179, %s184
          %s186 = sadd.s32 %s27, %s26
          %s187 = smul.addr %s186, 128
          %s188 = scalar_lea.hbm %s0, %s187
          %s190 = sshll.u32 %s182, 4
          %s191 = int_to_ptr.vmem [resolvable:$true] %s190
          %193 = dma.hbm_to_vmem [thread:$0]  %s188, 128, %s191, %s179
        $region24: #{tpu_custom_call.1} parent=19 // pred_fallthru
          _
        // Predicated region
        $region25: #{tpu_custom_call.1} parent=19 // pred_check
          %p194 = pneg %p88
        $region26: #{tpu_custom_call.1} parent=19 // pred_check_branch
          %196 = sbr.rel (%p194) target = $region28
        $region27: #{tpu_custom_call.1} parent=19 // pred_region
          %s197 = sand.u32 %s78, 1
          %s198 = scalar_lea.sflag [#allocation7], %s197
          %s199 = sand.u32 %s78, 1
          %s200 = smul.addr %s199, 32
          %s201 = scalar_lea.vmem [#allocation6], %s200
          %s203 = ssub.s32 512, 512
          %204 = vsyncadd %s198, %s203
          %s205 = smul.addr %s26, 4
          %s206 = sadd.s32 %s28, %s205
          %s207 = smul.addr %s206, 128
          %s208 = scalar_lea.hbm %s1, %s207
          %s209 = sshll.u32 %s201, 4
          %s210 = int_to_ptr.vmem [resolvable:$true] %s209
          %215 = dma.hbm_to_vmem [thread:$0]  %s208, 512, %s210, %s198, 128, 128, 8
        $region28: #{tpu_custom_call.1} parent=19 // pred_fallthru
          _
      $region20: #{tpu_custom_call.1} parent=5 // pred_fallthru
        _
      %p216 = scmp.le.s32.totalorder 1, %s19
      %p217 = scmp.lt.s32.totalorder %s19, 3
      %p218 = pnand %p216, %p217
      %p219 = pneg %p218
      // Predicated region
      $region29: #{tpu_custom_call.1} parent=5 // pred_check
        _
      $region30: #{tpu_custom_call.1} parent=5 // pred_check_branch
        %221 = sbr.rel (%p218) target = $region32
      $region31: #{tpu_custom_call.1} parent=5 // pred_region
        %s222 = ssub.s32 %s19, 1
        %s223 = sand.u32 %s53, 1
        %s224 = scalar_lea.sflag [#allocation3], %s223
        %s225 = sand.u32 %s53, 1
        %s226 = smul.addr %s225, 8
        %s227 = scalar_lea.vmem [#allocation2], %s226
        // Predicated region
        $region33: #{tpu_custom_call.1} parent=31 // pred_check
          %p228 = pneg %p66
        $region34: #{tpu_custom_call.1} parent=31 // pred_check_branch
          %230 = sbr.rel (%p228) target = $region36
        $region35: #{tpu_custom_call.1} parent=31 // pred_region
          %231 = dma.done %s224, 128
        $region36: #{tpu_custom_call.1} parent=31 // pred_fallthru
          _
        %s232 = sand.u32 %s81, 1
        %s233 = scalar_lea.sflag [#allocation7], %s232
        %s234 = sand.u32 %s81, 1
        %s235 = smul.addr %s234, 32
        %s236 = scalar_lea.vmem [#allocation6], %s235
        // Predicated region
        $region37: #{tpu_custom_call.1} parent=31 // pred_check
          %p237 = pneg %p94
        $region38: #{tpu_custom_call.1} parent=31 // pred_check_branch
          %239 = sbr.rel (%p237) target = $region40
        $region39: #{tpu_custom_call.1} parent=31 // pred_region
          %240 = dma.done %s233, 512
        $region40: #{tpu_custom_call.1} parent=31 // pred_fallthru
          _
        // Predicated region
        $region41: #{tpu_custom_call.1} parent=31 // pred_check
          %p241 = pneg %p115
        $region42: #{tpu_custom_call.1} parent=31 // pred_check_branch
          %243 = sbr.rel (%p241) target = $region44
        $region43: #{tpu_custom_call.1} parent=31 // pred_region
          %244 = dma.done [#allocation5], 16
        $region44: #{tpu_custom_call.1} parent=31 // pred_fallthru
          _
        %245 = sfence
        %s246 = sand.u32 %s53, 1
        %s247 = scalar_lea.sflag [#allocation3], %s246
        %s248 = sand.u32 %s53, 1
        %s249 = smul.addr %s248, 8
        %s250 = scalar_lea.vmem [#allocation2], %s249
        %p251 = pneg %p66
        %p252 = pneg %p63
        %s253 = sand.u32 %s81, 1
        %s254 = scalar_lea.sflag [#allocation7], %s253
        %s255 = sand.u32 %s81, 1
        %s256 = smul.addr %s255, 32
        %s257 = scalar_lea.vmem [#allocation6], %s256
        %p258 = pneg %p94
        %p259 = pneg %p91
        %p260 = pneg %p115
        %p261 = pneg %p112
        %p262 = pneg %p145
        %p263 = pneg %p142
        %s264 = sand.u32 %s132, 1
        %s265 = scalar_lea.sflag [#allocation4], %s264
        %s266 = sand.u32 %s132, 1
        %s267 = smul.addr %s266, 8
        %s268 = scalar_lea.vmem [#allocation9], %s267
        %v269 = vld [vmem:[%s227] sm:$0xff]
        %v270 = vld [vmem:[%s236] sm:$0xff]
        %v271 = vld [vmem:[%s236 + $0x8] sm:$0xff]
        %v272 = vld [vmem:[%s236 + $0x10] sm:$0xff]
        %v273 = vld [vmem:[%s236 + $0x18] sm:$0xff]
        %275 = vset.pattern.permute.xlu0 0
        %276 = vperm.xlu0 %275, %v269
        %v277 = vpop.permute.xlu0 %276
        %v279 = vlaneseq
        %v280 = vshrl.u32 %v279, 7
        %v281 = vsub.s32 0, %v280
        %v282 = vrot.slane %v270, %v281
        %v283 = vadd.f32 %v277, %v282
        %v284 = vtanh.pop %v283
        %s285 = sld [smem:[#allocation8]]
        %v286 = vstv %s285
        %v287 = vmul.f32 %v286, %v284
        %v288 = vadd.f32 %v287, 0.0
        %289 = vset.pattern.permute.xlu0 1
        %290 = vperm.xlu0 %289, %v269
        %v291 = vpop.permute.xlu0 %290
        %v293 = vlaneseq
        %v294 = vshrl.u32 %v293, 7
        %v295 = vsub.s32 1, %v294
        %v296 = vrot.slane %v270, %v295
        %v297 = vadd.f32 %v291, %v296
        %v298 = vtanh.pop %v297
        %s299 = sld [smem:[#allocation8 + $0x1]]
        %v300 = vstv %s299
        %v301 = vmul.f32 %v300, %v298
        %v302 = vadd.f32 %v288, %v301
        %303 = vset.pattern.permute.xlu0 2
        %304 = vperm.xlu0 %303, %v269
        %v305 = vpop.permute.xlu0 %304
        %v307 = vlaneseq
        %v308 = vshrl.u32 %v307, 7
        %v309 = vsub.s32 2, %v308
        %v310 = vrot.slane %v270, %v309
        %v311 = vadd.f32 %v305, %v310
        %v312 = vtanh.pop %v311
        %s313 = sld [smem:[#allocation8 + $0x2]]
        %v314 = vstv %s313
        %v315 = vmul.f32 %v314, %v312
        %v316 = vadd.f32 %v302, %v315
        %317 = vset.pattern.permute.xlu0 3
        %318 = vperm.xlu0 %317, %v269
        %v319 = vpop.permute.xlu0 %318
        %v321 = vlaneseq
        %v322 = vshrl.u32 %v321, 7
        %v323 = vsub.s32 3, %v322
        %v324 = vrot.slane %v270, %v323
        %v325 = vadd.f32 %v319, %v324
        %v326 = vtanh.pop %v325
        %s327 = sld [smem:[#allocation8 + $0x3]]
        %v328 = vstv %s327
        %v329 = vmul.f32 %v328, %v326
        %v330 = vadd.f32 %v316, %v329
        %331 = vset.pattern.permute.xlu0 4
        %332 = vperm.xlu0 %331, %v269
        %v333 = vpop.permute.xlu0 %332
        %v335 = vlaneseq
        %v336 = vshrl.u32 %v335, 7
        %v337 = vsub.s32 4, %v336
        %v338 = vrot.slane %v270, %v337
        %v339 = vadd.f32 %v333, %v338
        %v340 = vtanh.pop %v339
        %s341 = sld [smem:[#allocation8 + $0x4]]
        %v342 = vstv %s341
        %v343 = vmul.f32 %v342, %v340
        %v344 = vadd.f32 %v330, %v343
        %345 = vset.pattern.permute.xlu0 5
        %346 = vperm.xlu0 %345, %v269
        %v347 = vpop.permute.xlu0 %346
        %v349 = vlaneseq
        %v350 = vshrl.u32 %v349, 7
        %v351 = vsub.s32 5, %v350
        %v352 = vrot.slane %v270, %v351
        %v353 = vadd.f32 %v347, %v352
        %v354 = vtanh.pop %v353
        %s355 = sld [smem:[#allocation8 + $0x5]]
        %v356 = vstv %s355
        %v357 = vmul.f32 %v356, %v354
        %v358 = vadd.f32 %v344, %v357
        %359 = vset.pattern.permute.xlu0 6
        %360 = vperm.xlu0 %359, %v269
        %v361 = vpop.permute.xlu0 %360
        %v363 = vlaneseq
        %v364 = vshrl.u32 %v363, 7
        %v365 = vsub.s32 6, %v364
        %v366 = vrot.slane %v270, %v365
        %v367 = vadd.f32 %v361, %v366
        %v368 = vtanh.pop %v367
        %s369 = sld [smem:[#allocation8 + $0x6]]
        %v370 = vstv %s369
        %v371 = vmul.f32 %v370, %v368
        %v372 = vadd.f32 %v358, %v371
        %373 = vset.pattern.permute.xlu0 7
        %374 = vperm.xlu0 %373, %v269
        %v375 = vpop.permute.xlu0 %374
        %v377 = vlaneseq
        %v378 = vshrl.u32 %v377, 7
        %v379 = vsub.s32 7, %v378
        %v380 = vrot.slane %v270, %v379
        %v381 = vadd.f32 %v375, %v380
        %v382 = vtanh.pop %v381
        %s383 = sld [smem:[#allocation8 + $0x7]]
        %v384 = vstv %s383
        %v385 = vmul.f32 %v384, %v382
        %v386 = vadd.f32 %v372, %v385
        %387 = vset.pattern.permute.xlu0 8
        %388 = vperm.xlu0 %387, %v269
        %v389 = vpop.permute.xlu0 %388
        %v391 = vlaneseq
        %v392 = vshrl.u32 %v391, 7
        %v393 = vsub.s32 0, %v392
        %v394 = vrot.slane %v271, %v393
        %v395 = vadd.f32 %v389, %v394
        %v396 = vtanh.pop %v395
        %s397 = sld [smem:[#allocation8 + $0x8]]
        %v398 = vstv %s397
        %v399 = vmul.f32 %v398, %v396
        %v400 = vadd.f32 %v386, %v399
        %401 = vset.pattern.permute.xlu0 9
        %402 = vperm.xlu0 %401, %v269
        %v403 = vpop.permute.xlu0 %402
        %v405 = vlaneseq
        %v406 = vshrl.u32 %v405, 7
        %v407 = vsub.s32 1, %v406
        %v408 = vrot.slane %v271, %v407
        %v409 = vadd.f32 %v403, %v408
        %v410 = vtanh.pop %v409
        %s411 = sld [smem:[#allocation8 + $0x9]]
        %v412 = vstv %s411
        %v413 = vmul.f32 %v412, %v410
        %v414 = vadd.f32 %v400, %v413
        %415 = vset.pattern.permute.xlu0 10
        %416 = vperm.xlu0 %415, %v269
        %v417 = vpop.permute.xlu0 %416
        %v419 = vlaneseq
        %v420 = vshrl.u32 %v419, 7
        %v421 = vsub.s32 2, %v420
        %v422 = vrot.slane %v271, %v421
        %v423 = vadd.f32 %v417, %v422
        %v424 = vtanh.pop %v423
        %s425 = sld [smem:[#allocation8 + $0xa]]
        %v426 = vstv %s425
        %v427 = vmul.f32 %v426, %v424
        %v428 = vadd.f32 %v414, %v427
        %429 = vset.pattern.permute.xlu0 11
        %430 = vperm.xlu0 %429, %v269
        %v431 = vpop.permute.xlu0 %430
        %v433 = vlaneseq
        %v434 = vshrl.u32 %v433, 7
        %v435 = vsub.s32 3, %v434
        %v436 = vrot.slane %v271, %v435
        %v437 = vadd.f32 %v431, %v436
        %v438 = vtanh.pop %v437
        %s439 = sld [smem:[#allocation8 + $0xb]]
        %v440 = vstv %s439
        %v441 = vmul.f32 %v440, %v438
        %v442 = vadd.f32 %v428, %v441
        %443 = vset.pattern.permute.xlu0 12
        %444 = vperm.xlu0 %443, %v269
        %v445 = vpop.permute.xlu0 %444
        %v447 = vlaneseq
        %v448 = vshrl.u32 %v447, 7
        %v449 = vsub.s32 4, %v448
        %v450 = vrot.slane %v271, %v449
        %v451 = vadd.f32 %v445, %v450
        %v452 = vtanh.pop %v451
        %s453 = sld [smem:[#allocation8 + $0xc]]
        %v454 = vstv %s453
        %v455 = vmul.f32 %v454, %v452
        %v456 = vadd.f32 %v442, %v455
        %457 = vset.pattern.permute.xlu0 13
        %458 = vperm.xlu0 %457, %v269
        %v459 = vpop.permute.xlu0 %458
        %v461 = vlaneseq
        %v462 = vshrl.u32 %v461, 7
        %v463 = vsub.s32 5, %v462
        %v464 = vrot.slane %v271, %v463
        %v465 = vadd.f32 %v459, %v464
        %v466 = vtanh.pop %v465
        %s467 = sld [smem:[#allocation8 + $0xd]]
        %v468 = vstv %s467
        %v469 = vmul.f32 %v468, %v466
        %v470 = vadd.f32 %v456, %v469
        %471 = vset.pattern.permute.xlu0 14
        %472 = vperm.xlu0 %471, %v269
        %v473 = vpop.permute.xlu0 %472
        %v475 = vlaneseq
        %v476 = vshrl.u32 %v475, 7
        %v477 = vsub.s32 6, %v476
        %v478 = vrot.slane %v271, %v477
        %v479 = vadd.f32 %v473, %v478
        %v480 = vtanh.pop %v479
        %s481 = sld [smem:[#allocation8 + $0xe]]
        %v482 = vstv %s481
        %v483 = vmul.f32 %v482, %v480
        %v484 = vadd.f32 %v470, %v483
        %485 = vset.pattern.permute.xlu0 15
        %486 = vperm.xlu0 %485, %v269
        %v487 = vpop.permute.xlu0 %486
        %v489 = vlaneseq
        %v490 = vshrl.u32 %v489, 7
        %v491 = vsub.s32 7, %v490
        %v492 = vrot.slane %v271, %v491
        %v493 = vadd.f32 %v487, %v492
        %v494 = vtanh.pop %v493
        %s495 = sld [smem:[#allocation8 + $0xf]]
        %v496 = vstv %s495
        %v497 = vmul.f32 %v496, %v494
        %v498 = vadd.f32 %v484, %v497
        %499 = vset.pattern.permute.xlu0 16
        %500 = vperm.xlu0 %499, %v269
        %v501 = vpop.permute.xlu0 %500
        %v503 = vlaneseq
        %v504 = vshrl.u32 %v503, 7
        %v505 = vsub.s32 0, %v504
        %v506 = vrot.slane %v272, %v505
        %v507 = vadd.f32 %v501, %v506
        %v508 = vtanh.pop %v507
        %s509 = sld [smem:[#allocation8 + $0x10]]
        %v510 = vstv %s509
        %v511 = vmul.f32 %v510, %v508
        %v512 = vadd.f32 %v498, %v511
        %513 = vset.pattern.permute.xlu0 17
        %514 = vperm.xlu0 %513, %v269
        %v515 = vpop.permute.xlu0 %514
        %v517 = vlaneseq
        %v518 = vshrl.u32 %v517, 7
        %v519 = vsub.s32 1, %v518
        %v520 = vrot.slane %v272, %v519
        %v521 = vadd.f32 %v515, %v520
        %v522 = vtanh.pop %v521
        %s523 = sld [smem:[#allocation8 + $0x11]]
        %v524 = vstv %s523
        %v525 = vmul.f32 %v524, %v522
        %v526 = vadd.f32 %v512, %v525
        %527 = vset.pattern.permute.xlu0 18
        %528 = vperm.xlu0 %527, %v269
        %v529 = vpop.permute.xlu0 %528
        %v531 = vlaneseq
        %v532 = vshrl.u32 %v531, 7
        %v533 = vsub.s32 2, %v532
        %v534 = vrot.slane %v272, %v533
        %v535 = vadd.f32 %v529, %v534
        %v536 = vtanh.pop %v535
        %s537 = sld [smem:[#allocation8 + $0x12]]
        %v538 = vstv %s537
        %v539 = vmul.f32 %v538, %v536
        %v540 = vadd.f32 %v526, %v539
        %541 = vset.pattern.permute.xlu0 19
        %542 = vperm.xlu0 %541, %v269
        %v543 = vpop.permute.xlu0 %542
        %v545 = vlaneseq
        %v546 = vshrl.u32 %v545, 7
        %v547 = vsub.s32 3, %v546
        %v548 = vrot.slane %v272, %v547
        %v549 = vadd.f32 %v543, %v548
        %v550 = vtanh.pop %v549
        %s551 = sld [smem:[#allocation8 + $0x13]]
        %v552 = vstv %s551
        %v553 = vmul.f32 %v552, %v550
        %v554 = vadd.f32 %v540, %v553
        %555 = vset.pattern.permute.xlu0 20
        %556 = vperm.xlu0 %555, %v269
        %v557 = vpop.permute.xlu0 %556
        %v559 = vlaneseq
        %v560 = vshrl.u32 %v559, 7
        %v561 = vsub.s32 4, %v560
        %v562 = vrot.slane %v272, %v561
        %v563 = vadd.f32 %v557, %v562
        %v564 = vtanh.pop %v563
        %s565 = sld [smem:[#allocation8 + $0x14]]
        %v566 = vstv %s565
        %v567 = vmul.f32 %v566, %v564
        %v568 = vadd.f32 %v554, %v567
        %569 = vset.pattern.permute.xlu0 21
        %570 = vperm.xlu0 %569, %v269
        %v571 = vpop.permute.xlu0 %570
        %v573 = vlaneseq
        %v574 = vshrl.u32 %v573, 7
        %v575 = vsub.s32 5, %v574
        %v576 = vrot.slane %v272, %v575
        %v577 = vadd.f32 %v571, %v576
        %v578 = vtanh.pop %v577
        %s579 = sld [smem:[#allocation8 + $0x15]]
        %v580 = vstv %s579
        %v581 = vmul.f32 %v580, %v578
        %v582 = vadd.f32 %v568, %v581
        %583 = vset.pattern.permute.xlu0 22
        %584 = vperm.xlu0 %583, %v269
        %v585 = vpop.permute.xlu0 %584
        %v587 = vlaneseq
        %v588 = vshrl.u32 %v587, 7
        %v589 = vsub.s32 6, %v588
        %v590 = vrot.slane %v272, %v589
        %v591 = vadd.f32 %v585, %v590
        %v592 = vtanh.pop %v591
        %s593 = sld [smem:[#allocation8 + $0x16]]
        %v594 = vstv %s593
        %v595 = vmul.f32 %v594, %v592
        %v596 = vadd.f32 %v582, %v595
        %597 = vset.pattern.permute.xlu0 23
        %598 = vperm.xlu0 %597, %v269
        %v599 = vpop.permute.xlu0 %598
        %v601 = vlaneseq
        %v602 = vshrl.u32 %v601, 7
        %v603 = vsub.s32 7, %v602
        %v604 = vrot.slane %v272, %v603
        %v605 = vadd.f32 %v599, %v604
        %v606 = vtanh.pop %v605
        %s607 = sld [smem:[#allocation8 + $0x17]]
        %v608 = vstv %s607
        %v609 = vmul.f32 %v608, %v606
        %v610 = vadd.f32 %v596, %v609
        %611 = vset.pattern.permute.xlu0 24
        %612 = vperm.xlu0 %611, %v269
        %v613 = vpop.permute.xlu0 %612
        %v615 = vlaneseq
        %v616 = vshrl.u32 %v615, 7
        %v617 = vsub.s32 0, %v616
        %v618 = vrot.slane %v273, %v617
        %v619 = vadd.f32 %v613, %v618
        %v620 = vtanh.pop %v619
        %s621 = sld [smem:[#allocation8 + $0x18]]
        %v622 = vstv %s621
        %v623 = vmul.f32 %v622, %v620
        %v624 = vadd.f32 %v610, %v623
        %625 = vset.pattern.permute.xlu0 25
        %626 = vperm.xlu0 %625, %v269
        %v627 = vpop.permute.xlu0 %626
        %v629 = vlaneseq
        %v630 = vshrl.u32 %v629, 7
        %v631 = vsub.s32 1, %v630
        %v632 = vrot.slane %v273, %v631
        %v633 = vadd.f32 %v627, %v632
        %v634 = vtanh.pop %v633
        %s635 = sld [smem:[#allocation8 + $0x19]]
        %v636 = vstv %s635
        %v637 = vmul.f32 %v636, %v634
        %v638 = vadd.f32 %v624, %v637
        %639 = vset.pattern.permute.xlu0 26
        %640 = vperm.xlu0 %639, %v269
        %v641 = vpop.permute.xlu0 %640
        %v643 = vlaneseq
        %v644 = vshrl.u32 %v643, 7
        %v645 = vsub.s32 2, %v644
        %v646 = vrot.slane %v273, %v645
        %v647 = vadd.f32 %v641, %v646
        %v648 = vtanh.pop %v647
        %s649 = sld [smem:[#allocation8 + $0x1a]]
        %v650 = vstv %s649
        %v651 = vmul.f32 %v650, %v648
        %v652 = vadd.f32 %v638, %v651
        %653 = vset.pattern.permute.xlu0 27
        %654 = vperm.xlu0 %653, %v269
        %v655 = vpop.permute.xlu0 %654
        %v657 = vlaneseq
        %v658 = vshrl.u32 %v657, 7
        %v659 = vsub.s32 3, %v658
        %v660 = vrot.slane %v273, %v659
        %v661 = vadd.f32 %v655, %v660
        %v662 = vtanh.pop %v661
        %s663 = sld [smem:[#allocation8 + $0x1b]]
        %v664 = vstv %s663
        %v665 = vmul.f32 %v664, %v662
        %v666 = vadd.f32 %v652, %v665
        %667 = vset.pattern.permute.xlu0 28
        %668 = vperm.xlu0 %667, %v269
        %v669 = vpop.permute.xlu0 %668
        %v671 = vlaneseq
        %v672 = vshrl.u32 %v671, 7
        %v673 = vsub.s32 4, %v672
        %v674 = vrot.slane %v273, %v673
        %v675 = vadd.f32 %v669, %v674
        %v676 = vtanh.pop %v675
        %s677 = sld [smem:[#allocation8 + $0x1c]]
        %v678 = vstv %s677
        %v679 = vmul.f32 %v678, %v676
        %v680 = vadd.f32 %v666, %v679
        %681 = vset.pattern.permute.xlu0 29
        %682 = vperm.xlu0 %681, %v269
        %v683 = vpop.permute.xlu0 %682
        %v685 = vlaneseq
        %v686 = vshrl.u32 %v685, 7
        %v687 = vsub.s32 5, %v686
        %v688 = vrot.slane %v273, %v687
        %v689 = vadd.f32 %v683, %v688
        %v690 = vtanh.pop %v689
        %s691 = sld [smem:[#allocation8 + $0x1d]]
        %v692 = vstv %s691
        %v693 = vmul.f32 %v692, %v690
        %v694 = vadd.f32 %v680, %v693
        %695 = vset.pattern.permute.xlu0 30
        %696 = vperm.xlu0 %695, %v269
        %v697 = vpop.permute.xlu0 %696
        %v699 = vlaneseq
        %v700 = vshrl.u32 %v699, 7
        %v701 = vsub.s32 6, %v700
        %v702 = vrot.slane %v273, %v701
        %v703 = vadd.f32 %v697, %v702
        %v704 = vtanh.pop %v703
        %s705 = sld [smem:[#allocation8 + $0x1e]]
        %v706 = vstv %s705
        %v707 = vmul.f32 %v706, %v704
        %v708 = vadd.f32 %v694, %v707
        %709 = vset.pattern.permute.xlu0 31
        %710 = vperm.xlu0 %709, %v269
        %v711 = vpop.permute.xlu0 %710
        %v713 = vlaneseq
        %v714 = vshrl.u32 %v713, 7
        %v715 = vsub.s32 7, %v714
        %v716 = vrot.slane %v273, %v715
        %v717 = vadd.f32 %v711, %v716
        %v718 = vtanh.pop %v717
        %s719 = sld [smem:[#allocation8 + $0x1f]]
        %v720 = vstv %s719
        %v721 = vmul.f32 %v720, %v718
        %v722 = vadd.f32 %v708, %v721
        %723 = vst [vmem:[%s268] sm:$0xff] %v722
        %s724 = sand.u32 %s132, 1
        %s725 = scalar_lea.sflag [#allocation4], %s724
        %s726 = sand.u32 %s132, 1
        %s727 = smul.addr %s726, 8
        %s728 = scalar_lea.vmem [#allocation9], %s727
        // Predicated region
        $region45: #{tpu_custom_call.1} parent=31 // pred_check
          %p729 = pneg %p142
        $region46: #{tpu_custom_call.1} parent=31 // pred_check_branch
          %731 = sbr.rel (%p729) target = $region48
        $region47: #{tpu_custom_call.1} parent=31 // pred_region
          %s733 = ssub.s32 128, 128
          %734 = vsyncadd %s725, %s733
          %s735 = sadd.s32 %s31, %s30
          %s736 = sadd.s32 %s735, %s29
          %s737 = smul.addr %s736, 128
          %s738 = scalar_lea.hbm %s3, %s737
          %s740 = sshll.u32 %s728, 4
          %s741 = int_to_ptr.vmem [resolvable:$true] %s740
          %743 = dma.vmem_to_hbm [thread:$0]  %s741, 128, %s738, %s725
        $region48: #{tpu_custom_call.1} parent=31 // pred_fallthru
          _
      $region32: #{tpu_custom_call.1} parent=5 // pred_fallthru
        _
      %p744 = scmp.le.s32.totalorder 2, %s19
      // Predicated region
      $region49: #{tpu_custom_call.1} parent=5 // pred_check
        %p745 = pneg %p744
      $region50: #{tpu_custom_call.1} parent=5 // pred_check_branch
        %747 = sbr.rel (%p745) target = $region52
      $region51: #{tpu_custom_call.1} parent=5 // pred_region
        %s748 = ssub.s32 %s19, 2
        // Predicated region
        $region53: #{tpu_custom_call.1} parent=51 // pred_check
          %p749 = pneg %p148
        $region54: #{tpu_custom_call.1} parent=51 // pred_check_branch
          %751 = sbr.rel (%p749) target = $region56
        $region55: #{tpu_custom_call.1} parent=51 // pred_region
          %s752 = sand.u32 %s133, 1
          %s753 = scalar_lea.sflag [#allocation4], %s752
          %s754 = sand.u32 %s133, 1
          %s755 = smul.addr %s754, 8
          %s756 = scalar_lea.vmem [#allocation9], %s755
          %757 = dma.done %s753, 128
        $region56: #{tpu_custom_call.1} parent=51 // pred_fallthru
          _
      $region52: #{tpu_custom_call.1} parent=5 // pred_fallthru
        _
    $region6: #{tpu_custom_call.1} parent=1 // loop_footer
      %s23 = sadd.s32 1, %s19
    $region7: #{tpu_custom_call.1} parent=1 // loop_footer_branch
      %18 = sbr.rel target = $region3
    $region8: #{tpu_custom_call.1} parent=1 // loop_exit
      _
    %758 = vsyncpa [#allocation3], 1
    %s759 = scalar_lea.sflag [#allocation3], 1
    %760 = vsyncpa %s759, 1
    %761 = vsyncpa [#allocation7], 1
    %s762 = scalar_lea.sflag [#allocation7], 1
    %763 = vsyncpa %s762, 1
    %764 = vsyncpa [#allocation4], 1
    %s765 = scalar_lea.sflag [#allocation4], 1
    %766 = vsyncpa %s765, 1
    %767 = vsyncpa [#allocation5], 1
    %s768 = scalar_lea.sflag [#allocation5], 1
    %769 = vsyncpa %s768, 1

</llo_original>
